<compile_context>
chip_gen: v7x
topology: tpu7x:2x2x1
jax: 0.10.0
libtpu: 0.0.40
codegen_flags: <defaults>
</compile_context>

<pallas_src>
import numpy as np

import jax
import jax.numpy as jnp
from jax import lax
from jax.experimental import pallas as pl
from jax.experimental.pallas import tpu as pltpu


_ROW_TILE = 1024                  # row tile for the linear kernels (v7x-safe, v6e-friendly)
_VMEM_LIMIT = 48 * 1024 * 1024    # scoped-VMEM cap; leaves headroom on v7x (64 MiB / TC)


def _pick_row_tile(R):
    tr = min(_ROW_TILE, R)
    # give the row kernels at least 2 grid steps so DMA/compute overlap and v7x
    # megacore sharding are possible (keeps the sublane tile a multiple of 8).
    if tr == R and R % 16 == 0 and R >= 32:
        tr = R // 2
    return tr


def _pick_cluster_block(Beff):
    # largest divisor of Beff that keeps the output sublane tile a multiple of 8 and
    # gives the cluster kernel >= 4 (else >= 2) grid steps.
    for min_steps in (4, 2, 1):
        cands = [d for d in range(1, Beff + 1)
                 if Beff % d == 0 and d % 8 == 0 and Beff // d >= min_steps]
        if cands:
            return max(cands)
    return Beff


# --------------------- kernel 1: fused value/center projection ---------------------

def _fused_proj_kernel(x_ref, w_ref, b_ref, o_ref):
    # x: (TR, Cin) bf16, w: (Cin, Cpad) bf16, b: (1, Cpad) f32 -> o: (TR, Cpad) f32
    o_ref[...] = (jnp.dot(x_ref[...], w_ref[...],
                          preferred_element_type=jnp.float32)
                  + b_ref[...]).astype(o_ref.dtype)


def fused_proj_pallas(x, w, b):
    R, Cin = x.shape
    Cout = w.shape[1]
    TR = _pick_row_tile(R)
    return pl.pallas_call(
        _fused_proj_kernel,
        out_shape=jax.ShapeDtypeStruct((R, Cout), jnp.float32),
        grid=(pl.cdiv(R, TR),),
        in_specs=[pl.BlockSpec((TR, Cin), lambda i: (i, 0)),
                  pl.BlockSpec((Cin, Cout), lambda i: (0, 0)),
                  pl.BlockSpec((1, Cout), lambda i: (0, 0))],
        out_specs=pl.BlockSpec((TR, Cout), lambda i: (i, 0)),
        compiler_params=pltpu.CompilerParams(
            dimension_semantics=("parallel",),
            vmem_limit_bytes=_VMEM_LIMIT),
    )(x, w, b.reshape(1, -1))


# --------------------------- kernel 2: batched cluster core -------------------------

def _cluster_kernel(alpha_ref, beta_ref, pool_ref, e2_ref, t_ref, val_ref, xq_ref, o_ref):
    # pool: (M, N) constant adaptive-avg-pool matrix
    # e2  : (N, N*C) lane-expansion constant, t: (C, N*C) lane-tiling constant
    # val : (Bb, N, C) bf16 values, xq: (Bb, N, C) f32 queries -> o: (Bb, N*C) f32
    alpha = alpha_ref[0, 0]
    beta = beta_ref[0, 0]
    pool = pool_ref[...]
    E2 = e2_ref[...]
    T = t_ref[...]
    val = val_ref[...].astype(jnp.float32)
    xq = xq_ref[...]
    Bb, N, C = xq.shape
    M = pool.shape[0]

    # adaptive average pooling fused in-kernel (centers & value_centers)
    poolb = jnp.broadcast_to(pool[None], (Bb, M, N))
    cent = jnp.einsum('bmn,bnc->bmc', poolb, xq,
                      preferred_element_type=jnp.float32)
    vcent = jnp.einsum('bmn,bnc->bmc', poolb, val,
                       preferred_element_type=jnp.float32)

    def l2n(t):
        ss = jnp.sum(t * t, axis=-1, keepdims=True)
        # eps matches F.normalize(eps=1e-12) (applied on the squared norm)
        return t * lax.rsqrt(jnp.maximum(ss, 1e-24))

    cossim = jnp.einsum('bmd,bnd->bmn', l2n(cent), l2n(xq),
                        preferred_element_type=jnp.float32)
    sim = jax.nn.sigmoid(beta + alpha * cossim)                 # (Bb, M, N) f32

    # hard assignment: first argmax over centers, unrolled pairwise over the M centers
    best = sim[:, 0:1, :]
    idx = jnp.zeros(best.shape, jnp.int32)
    for m in range(1, M):
        s_m = sim[:, m:m + 1, :]
        gt = s_m > best
        best = jnp.where(gt, s_m, best)
        idx = jnp.where(gt, m, idx)
    m_ids = lax.broadcasted_iota(jnp.int32, sim.shape, 1)
    simm = sim * (m_ids == idx).astype(sim.dtype)               # (Bb, M, N)

    # cluster update (exact division; no approximate reciprocal)
    num = jnp.einsum('bmn,bnc->bmc', simm, val,
                     preferred_element_type=jnp.float32) + vcent
    den = jnp.sum(simm, axis=-1, keepdims=True) + 1.0
    cu = num / den                                              # (Bb, M, C)

    # dispatch back to patches, written as a lane-dense (Bb, N*C) slab (384 lanes)
    patches = jnp.zeros((Bb, N * C), jnp.float32)
    for m in range(M):
        sm = jnp.sum(simm[:, m:m + 1, :], axis=1)               # (Bb, N)
        cm = jnp.sum(cu[:, m:m + 1, :], axis=1)                 # (Bb, C)
        patches = patches + (jnp.dot(sm, E2, preferred_element_type=jnp.float32)
                             * jnp.dot(cm, T, preferred_element_type=jnp.float32))
    o_ref[...] = patches.astype(o_ref.dtype)


def cluster_core_pallas(val_seq, xq_seq, pool_mat, alpha, beta):
    Beff, N, C = xq_seq.shape
    M = pool_mat.shape[0]
    Bb = _pick_cluster_block(Beff)
    NC = N * C
    # host-built lane expansion constants: E2 expands a per-patch scalar across its C
    # lanes, T tiles a per-channel vector across the N patch groups.
    E2 = jnp.asarray(np.kron(np.eye(N, dtype=np.float32), np.ones((1, C), np.float32)))
    T = jnp.asarray(np.tile(np.eye(C, dtype=np.float32), (1, N)))
    a2 = jnp.reshape(alpha, (1, 1)).astype(jnp.float32)
    b2 = jnp.reshape(beta, (1, 1)).astype(jnp.float32)
    return pl.pallas_call(
        _cluster_kernel,
        out_shape=jax.ShapeDtypeStruct((Beff, NC), jnp.float32),
        grid=(Beff // Bb,),
        in_specs=[
            pl.BlockSpec((1, 1), lambda b: (0, 0),
                         memory_space=pltpu.MemorySpace.SMEM),
            pl.BlockSpec((1, 1), lambda b: (0, 0),
                         memory_space=pltpu.MemorySpace.SMEM),
            pl.BlockSpec((M, N), lambda b: (0, 0)),
            pl.BlockSpec((N, NC), lambda b: (0, 0)),
            pl.BlockSpec((C, NC), lambda b: (0, 0)),
            pl.BlockSpec((Bb, N, C), lambda b: (b, 0, 0)),
            pl.BlockSpec((Bb, N, C), lambda b: (b, 0, 0)),
        ],
        out_specs=pl.BlockSpec((Bb, NC), lambda b: (b, 0)),
        compiler_params=pltpu.CompilerParams(
            dimension_semantics=("parallel",),
            vmem_limit_bytes=_VMEM_LIMIT),
    )(a2, b2, pool_mat, E2, T, val_seq, xq_seq)


# ------------------ kernel 3: proj + residual + BN2-folded MLP + residual -----------

def _tail_kernel(pr_ref, xr_ref, wp_ref, bp_ref, w1_ref, b1_ref, w2_ref, b2_ref, o_ref):
    # token-mixer projection + residual (bf16 MXU operands, f32 accumulation)
    y = (xr_ref[...]
         + jnp.dot(pr_ref[...], wp_ref[...], preferred_element_type=jnp.float32)
         + bp_ref[...])
    # channel mixer: fc1(BN2 folded) -> exact GELU (f32 VPU/EUP) -> fc2, + residual
    h = jnp.dot(y.astype(w1_ref.dtype), w1_ref[...],
                preferred_element_type=jnp.float32) + b1_ref[...]
    h = 0.5 * h * (1.0 + lax.erf(h * 0.7071067811865475))
    o = y + jnp.dot(h.astype(w2_ref.dtype), w2_ref[...],
                    preferred_element_type=jnp.float32) + b2_ref[...]
    # NOTE: output lane width = dim (32) -> masked stores; only worth repacking into
    # (TR/4, 128) slabs if a bundle dump shows the vst slot saturating.
    o_ref[...] = o.astype(o_ref.dtype)


def tail_pallas(pr, xr, wp, bp, w1, b1, w2, b2):
    R, hd = pr.shape
    dim = wp.shape[1]
    hidden = w1.shape[1]
    TR = _pick_row_tile(R)
    wp = wp.astype(jnp.bfloat16)
    w1 = w1.astype(jnp.bfloat16)
    w2 = w2.astype(jnp.bfloat16)
    return pl.pallas_call(
        _tail_kernel,
        out_shape=jax.ShapeDtypeStruct((R, dim), jnp.float32),
        grid=(pl.cdiv(R, TR),),
        in_specs=[pl.BlockSpec((TR, hd), lambda i: (i, 0)),
                  pl.BlockSpec((TR, dim), lambda i: (i, 0)),
                  pl.BlockSpec((hd, dim), lambda i: (0, 0)),
                  pl.BlockSpec((1, dim), lambda i: (0, 0)),
                  pl.BlockSpec((dim, hidden), lambda i: (0, 0)),
                  pl.BlockSpec((1, hidden), lambda i: (0, 0)),
                  pl.BlockSpec((hidden, dim), lambda i: (0, 0)),
                  pl.BlockSpec((1, dim), lambda i: (0, 0))],
        out_specs=pl.BlockSpec((TR, dim), lambda i: (i, 0)),
        compiler_params=pltpu.CompilerParams(
            dimension_semantics=("parallel",),
            vmem_limit_bytes=_VMEM_LIMIT),
    )(pr, xr, wp, bp.reshape(1, -1), w1, b1.reshape(1, -1), w2, b2.reshape(1, -1))


# ------------------------------ ClusterBlock forward --------------------------------

def cluster_block_forward(x, p, heads, head_dim, fold_w, fold_h, pw, ph):
    eps = 1e-5
    B, dim, H, W = x.shape
    hd = heads * head_dim
    R = B * H * W

    # channels-last rows, computed once: input of kernel 1 AND residual input of kernel 3
    rows = jnp.transpose(x, (0, 2, 3, 1)).reshape(R, dim)

    # ---- fold BN1 (eval mode) into the fused value/center 1x1 conv ----
    s1 = p['bn1_gamma'] / jnp.sqrt(p['bn1_var'] + eps)
    t1 = p['bn1_beta'] - p['bn1_mean'] * s1

    def fold_bn(Wc, bc):                 # Wc is torch (Cout, Cin)
        return (Wc * s1[None, :]).T, bc + Wc @ t1

    Wv, bv = fold_bn(p['patch_w'], p['patch_b'])
    Wq, bq = fold_bn(p['center_w'], p['center_b'])

    # fused value|query weight, lane-padded to a multiple of 128 for unmasked stores
    Cout = 2 * hd
    Wcat = jnp.concatenate([Wv, Wq], axis=1)
    bcat = jnp.concatenate([bv, bq])
    pad = (-Cout) % 128
    if pad:
        Wcat = jnp.concatenate([Wcat, jnp.zeros((dim, pad), jnp.float32)], axis=1)
        bcat = jnp.concatenate([bcat, jnp.zeros((pad,), jnp.float32)])

    # kernel 1: bf16 operands, f32 accumulation (same numerics as default-precision f32)
    vq_rows = fused_proj_pallas(rows.astype(jnp.bfloat16),
                                Wcat.astype(jnp.bfloat16), bcat)    # (R, Cpad) f32

    # ---- fold spatial grid + split heads for value AND query (channels-last) ----
    wl, hl = H // fold_w, W // fold_h
    Beff = B * heads * fold_w * fold_h
    N = wl * hl
    M = pw * ph

    vq6 = vq_rows.reshape(B, fold_w, wl, fold_h, hl, Cout + pad)

    def fold_plane(t, dtype):
        t = t.reshape(B, fold_w, wl, fold_h, hl, heads, head_dim).astype(dtype)
        t = t.transpose(0, 5, 1, 3, 2, 4, 6)       # (B, heads, f1, f2, wl, hl, C)
        return t.reshape(Beff, N, head_dim)

    val_seq = fold_plane(vq6[..., :hd], jnp.bfloat16)     # values: bf16 (halved DMA)
    xq_seq = fold_plane(vq6[..., hd:Cout], jnp.float32)   # queries: f32 (argmax path)

    # constant adaptive-avg-pool matrix (built host-side, applied inside the kernel)
    pool_np = np.zeros((M, N), np.float32)
    scale = 1.0 / ((wl // pw) * (hl // ph))
    for m1 in range(pw):
        for m2 in range(ph):
            for i in range(m1 * (wl // pw), (m1 + 1) * (wl // pw)):
                for j in range(m2 * (hl // ph), (m2 + 1) * (hl // ph)):
                    pool_np[m1 * ph + m2, i * hl + j] = scale
    pool_mat = jnp.asarray(pool_np)

    patches_flat = cluster_core_pallas(val_seq, xq_seq, pool_mat,
                                       p['sim_alpha'], p['sim_beta'])   # (Beff, N*C) f32

    # un-fold back to channels-last rows (single transpose)
    pt = patches_flat.reshape(B, heads, fold_w, fold_h, wl, hl, head_dim)
    pt = pt.transpose(0, 2, 4, 3, 5, 1, 6).reshape(R, hd)

    # ---- kernel 3: y = x + proj(patches);  out = y + fc2(gelu(fc1(bn2(y)))) ----
    s2 = p['bn2_gamma'] / jnp.sqrt(p['bn2_var'] + eps)
    t2 = p['bn2_beta'] - p['bn2_mean'] * s2
    W1_eff = (p['fc1_w'] * s2[None, :]).T          # (dim, hidden), BN2 folded into fc1
    b1_eff = p['fc1_b'] + p['fc1_w'] @ t2

    out_rows = tail_pallas(pt.astype(jnp.bfloat16), rows,
                           p['proj_w'].T, p['proj_b'],
                           W1_eff, b1_eff,
                           p['fc2_w'].T, p['fc2_b'])

    return out_rows.reshape(B, H, W, dim).transpose(0, 3, 1, 2)


# ------------------------------ pure-JAX reference ----------------------------------

def reference_forward(x, p, heads, head_dim, fold_w, fold_h, pw, ph):
    eps = 1e-5
    B, dim, H, W = x.shape
    hd = heads * head_dim

    def bn(t, g, b, m, v):
        return ((t - m[None, :, None, None])
                * (g / jnp.sqrt(v + eps))[None, :, None, None]
                + b[None, :, None, None])

    def conv1x1(t, Wc, bc):
        return jnp.einsum('bchw,oc->bohw', t, Wc) + bc[None, :, None, None]

    xn = bn(x, p['bn1_gamma'], p['bn1_beta'], p['bn1_mean'], p['bn1_var'])
    value = conv1x1(xn, p['patch_w'], p['patch_b'])
    xq = conv1x1(xn, p['center_w'], p['center_b'])

    def split_heads(t):
        return t.reshape(B, heads, head_dim, H, W).reshape(B * heads, head_dim, H, W)

    value, xq = split_heads(value), split_heads(xq)

    wl, hl = H // fold_w, W // fold_h

    def fold(t):
        t = t.reshape(B * heads, head_dim, fold_w, wl, fold_h, hl)
        return t.transpose(0, 2, 4, 1, 3, 5).reshape(
            B * heads * fold_w * fold_h, head_dim, wl, hl)

    value, xq = fold(value), fold(xq)
    b, c, w, h = xq.shape
    M, N = pw * ph, w * h

    def pool(t):
        return t.reshape(b, c, pw, w // pw, ph, h // ph).mean(axis=(3, 5))

    centers = pool(xq)
    value_centers = pool(value).reshape(b, c, M).transpose(0, 2, 1)

    def norm_l(t):
        return t / jnp.maximum(jnp.linalg.norm(t, axis=-1, keepdims=True), 1e-12)

    c_seq = centers.reshape(b, c, M).transpose(0, 2, 1)
    x_seq = xq.reshape(b, c, N).transpose(0, 2, 1)
    sim = jax.nn.sigmoid(p['sim_beta'][0] + p['sim_alpha'][0]
                         * jnp.einsum('bmd,bnd->bmn', norm_l(c_seq), norm_l(x_seq)))
    idx = jnp.argmax(sim, axis=1)
    mask = jax.nn.one_hot(idx, M, axis=1, dtype=sim.dtype)
    sim = sim * mask
    v_seq = value.reshape(b, c, N).transpose(0, 2, 1)
    cluster_update = ((jnp.einsum('bmn,bnc->bmc', sim, v_seq) + value_centers)
                      / (sim.sum(-1, keepdims=True) + 1.0))
    patches = jnp.einsum('bmn,bmc->bnc', sim, cluster_update)
    patches = patches.transpose(0, 2, 1).reshape(b, c, w, h)
    patches = patches.reshape(B * heads, fold_w, fold_h, c, w, h)
    patches = patches.transpose(0, 3, 1, 4, 2, 5).reshape(B * heads, c, H, W)
    patches = patches.reshape(B, heads, c, H, W).reshape(B, hd, H, W)
    patches = conv1x1(patches, p['proj_w'], p['proj_b'])
    x = x + patches

    xn2 = bn(x, p['bn2_gamma'], p['bn2_beta'], p['bn2_mean'], p['bn2_var'])
    t = xn2.transpose(0, 2, 3, 1)
    t = t @ p['fc1_w'].T + p['fc1_b']
    t = 0.5 * t * (1.0 + lax.erf(t * 0.7071067811865475))
    t = t @ p['fc2_w'].T + p['fc2_b']
    return x + t.transpose(0, 3, 1, 2)


# ----------------------------------------- main --------------------------------------

if __name__ == "__main__":
    B, dim, H, W = 2, 32, 8, 8
    heads, head_dim = 4, 24
    pw = ph = 2
    fold_w = fold_h = 2
    mlp_ratio = 2.0
    hidden = int(dim * mlp_ratio)
    hd = heads * head_dim

    x = jax.random.normal(jax.random.PRNGKey(0), (B, dim, H, W), dtype=jnp.float32)

    pkeys = jax.random.split(jax.random.PRNGKey(1), 20)

    def n(k, shape, scale=0.1):
        return (scale * jax.random.normal(k, shape)).astype(jnp.float32)

    params = {
        'bn1_gamma': 1.0 + n(pkeys[0], (dim,)),
        'bn1_beta': n(pkeys[1], (dim,)),
        'bn1_mean': n(pkeys[2], (dim,)),
        'bn1_var': (1.0 + 0.2 * jax.random.uniform(pkeys[3], (dim,))).astype(jnp.float32),
        'center_w': n(pkeys[4], (hd, dim)),
        'center_b': n(pkeys[5], (hd,)),
        'patch_w': n(pkeys[6], (hd, dim)),
        'patch_b': n(pkeys[7], (hd,)),
        'sim_alpha': jnp.ones((1,), jnp.float32),
        'sim_beta': jnp.zeros((1,), jnp.float32),
        'proj_w': n(pkeys[8], (dim, hd)),
        'proj_b': n(pkeys[9], (dim,)),
        'bn2_gamma': 1.0 + n(pkeys[10], (dim,)),
        'bn2_beta': n(pkeys[11], (dim,)),
        'bn2_mean': n(pkeys[12], (dim,)),
        'bn2_var': (1.0 + 0.2 * jax.random.uniform(pkeys[13], (dim,))).astype(jnp.float32),
        'fc1_w': n(pkeys[14], (hidden, dim)),
        'fc1_b': n(pkeys[15], (hidden,)),
        'fc2_w': n(pkeys[16], (dim, hidden)),
        'fc2_b': n(pkeys[17], (dim,)),
    }

    out = cluster_block_forward(x, params, heads, head_dim, fold_w, fold_h, pw, ph)
    out = jax.block_until_ready(out)

    ref = reference_forward(x, params, heads, head_dim, fold_w, fold_h, pw, ph)
    assert out.shape == ref.shape == (B, dim, H, W)
    assert jnp.allclose(out, ref, atol=5e-2, rtol=5e-2), \
        float(jnp.max(jnp.abs(out - ref)))
    print("KERNEL_OK")
</pallas_src>

<mosaic_0001>
module attributes {stable_mosaic.version = 11 : i64} {
  func.func @_fused_proj_kernel(%arg0: i32, %arg1: memref<64x32xbf16, #tpu.memory_space<vmem>>, %arg2: memref<32x256xbf16, #tpu.memory_space<vmem>>, %arg3: memref<1x256xf32, #tpu.memory_space<vmem>>, %arg4: memref<64x256xf32, #tpu.memory_space<vmem>>) attributes {dimension_semantics = [#tpu.dimension_semantics<parallel>], iteration_bounds = array<i64: 2>, scalar_prefetch = 0 : i64, scratch_operands = 0 : i64, tpu.core_type = #tpu.core_type<tc>, window_params = [{transform_indices = @transform_0, window_bounds = array<i64: 64, 32>}, {pipeline_mode = #tpu.pipeline_mode<synchronous>, transform_indices = @transform_1, window_bounds = array<i64: 32, 256>}, {pipeline_mode = #tpu.pipeline_mode<synchronous>, transform_indices = @transform_2, window_bounds = array<i64: 1, 256>}, {transform_indices = @transform_3, window_bounds = array<i64: 64, 256>}]} {
    %c0 = arith.constant 0 : index
    %c0_0 = arith.constant 0 : index
    %0 = vector.load %arg1[%c0, %c0_0] : memref<64x32xbf16, #tpu.memory_space<vmem>>, vector<64x32xbf16>
    %c0_1 = arith.constant 0 : index
    %c0_2 = arith.constant 0 : index
    %1 = vector.load %arg2[%c0_1, %c0_2] : memref<32x256xbf16, #tpu.memory_space<vmem>>, vector<32x256xbf16>
    %cst = arith.constant dense<0.000000e+00> : vector<64x256xf32>
    %2 = tpu.matmul %0, %1, %cst {dimension_numbers = #tpu.dot_dimension_numbers<[1], [0], [0], [1], [0, 0, 1, 1], [], []>} : vector<64x32xbf16>, vector<32x256xbf16>, vector<64x256xf32> -> vector<64x256xf32>
    %c0_3 = arith.constant 0 : index
    %c0_4 = arith.constant 0 : index
    %3 = vector.load %arg3[%c0_3, %c0_4] : memref<1x256xf32, #tpu.memory_space<vmem>>, vector<1x256xf32>
    %4 = vector.broadcast %3 : vector<1x256xf32> to vector<64x256xf32>
    %5 = arith.addf %2, %4 : vector<64x256xf32>
    %c0_5 = arith.constant 0 : index
    %c0_6 = arith.constant 0 : index
    %6 = vector.load %arg4[%c0_5, %c0_6] : memref<64x256xf32, #tpu.memory_space<vmem>>, vector<64x256xf32>
    tpu.vector_store %arg4[%c0_5, %c0_6], %5 {strides = array<i32>} : memref<64x256xf32, #tpu.memory_space<vmem>>, vector<64x256xf32>,
    return
  }
  func.func @transform_0(%arg0: i32) -> (i32, i32) {
    %c0_i32 = arith.constant 0 : i32
    %c0_i32_0 = arith.constant 0 : i32
    return %arg0, %c0_i32 : i32, i32
  }
  func.func @transform_1(%arg0: i32) -> (i32, i32) {
    %c0_i32 = arith.constant 0 : i32
    %c0_i32_0 = arith.constant 0 : i32
    %c0_i32_1 = arith.constant 0 : i32
    return %c0_i32, %c0_i32_0 : i32, i32
  }
  func.func @transform_2(%arg0: i32) -> (i32, i32) {
    %c0_i32 = arith.constant 0 : i32
    %c0_i32_0 = arith.constant 0 : i32
    %c0_i32_1 = arith.constant 0 : i32
    return %c0_i32, %c0_i32_0 : i32, i32
  }
  func.func @transform_3(%arg0: i32) -> (i32, i32) {
    %c0_i32 = arith.constant 0 : i32
    %c0_i32_0 = arith.constant 0 : i32
    return %arg0, %c0_i32 : i32, i32
  }
}

</mosaic_0001>

<llo_original>
// kernel: tpu_custom_call.1
$region0: #{tpu_custom_call.1}
  #allocation0 [shape = 'u32[]', space=smem, size = 0x4, offset = 0x4, fixed_abs, tag = 'smem constant byte address 0x4 - core index']
  #allocation1 [shape = 'u32[144,128]{1,0:T(1,128)}', space=vmem, size = 0x12000, scoped, tag = 'internal scratch']
  %s0 = inlined_call_operand.vmem [shape: bf16[128,32], index: 0, kind: input, shape index: {}]
  %s1 = inlined_call_operand.vmem [shape: bf16[32,256], index: 1, kind: input, shape index: {}]
  %s2 = inlined_call_operand.vmem [shape: f32[1,256], index: 2, kind: input, shape index: {}]
  %s3 = inlined_call_operand.hbm [shape: f32[128,256], index: 3, kind: output, shape index: {}]
  %s4 = sld [smem:[#allocation0]]
  $region45: #{tpu_custom_call.1} parent=0
    _
  %s6 = ssub.s32 1, %s4
  %s7 = scalar_select 0, %s6, %s4
  $region1: #{tpu_custom_call.1} parent=0
    #allocation2 [shape = 'u8[131072]{0}', space=vmem, size = 0x20000, scoped, tag = 'output window, operand 0']
    #allocation3 [shape = 's32[2]{0}', space=sflag, size = 0x8, scoped, tag = 'scoped memory for tpu_custom_call.1']
    %8 = vsyncpa [#allocation3], 0
    %s9 = scalar_lea.sflag [#allocation3], 1
    %10 = vsyncpa %s9, 0
    loop: start=0, step=1, limit=4
    $region2: #{tpu_custom_call.1} parent=1 // loop_pre_header
      _
    $region3: #{tpu_custom_call.1} parent=1 // loop_header
      %s12 = sphi 0, %s16
      %p13 = scmp.ge.s32.totalorder %s12, 4
      %s22 = sphi 0, %s24
      %s25 = sphi 0, %s22
      %s26 = sphi 0, %s25
      %s42 = sphi 0, %s26
      %s46 = sphi 0, %s46
      %s48 = sphi 0, %s46
      %s49 = sphi 0, %s48
      %s63 = sphi 0, %s49
      %s67 = sphi 0, %s67
      %s69 = sphi 0, %s67
      %s70 = sphi 0, %s69
      %s84 = sphi 0, %s70
      %s90 = sphi 0, %s92
      %s93 = sphi 0, %s90
      %s94 = sphi 0, %s93
      %s110 = sphi 0, %s94
    $region4: #{tpu_custom_call.1} parent=1 // loop_header_branch
      %15 = sbr.rel (%p13) target = $region8
    $region5: #{tpu_custom_call.1} parent=1 // loop_body
      %s17 = ssub.s32 %s12, 1
      %s18 = ssub.s32 %s12, 2
      %s19 = sadd.s32 %s12, 1
      %s20 = ssub.s32 %s12, %s19
      %p21 = scmp.eq.s32.totalorder %s20, 0
      %s23 = sadd.s32 %s22, 1
      %s24 = scalar_select %p21, %s22, %s23
      %p27 = pneg %p21
      %p28 = scmp.eq.s32.totalorder %s12, 1
      %p29 = por %p27, %p28
      %p30 = scmp.ne.s32.totalorder %s22, %s25
      %p31 = scmp.eq.s32.totalorder %s12, 0
      %p32 = por %p30, %p31
      %p33 = scmp.ne.s32.totalorder %s22, %s25
      %p34 = scmp.eq.s32.totalorder %s17, 1
      %p35 = por %p33, %p34
      %p36 = scmp.ne.s32.totalorder %s25, %s26
      %p37 = scmp.eq.s32.totalorder %s17, 0
      %p38 = por %p36, %p37
      %p39 = scmp.ne.s32.totalorder %s25, %s26
      %p40 = scmp.eq.s32.totalorder %s18, 1
      %p41 = por %p39, %p40
      %p43 = scmp.ne.s32.totalorder %s26, %s42
      %p44 = scmp.eq.s32.totalorder %s18, 0
      %p45 = por %p43, %p44
      %s47 = sadd.s32 %s46, 1
      %p50 = scmp.eq.s32.totalorder %s12, 1
      %p51 = scmp.ne.s32.totalorder %s46, %s48
      %p52 = scmp.eq.s32.totalorder %s12, 0
      %p53 = por %p51, %p52
      %p54 = scmp.ne.s32.totalorder %s46, %s48
      %p55 = scmp.eq.s32.totalorder %s17, 1
      %p56 = por %p54, %p55
      %p57 = scmp.ne.s32.totalorder %s48, %s49
      %p58 = scmp.eq.s32.totalorder %s17, 0
      %p59 = por %p57, %p58
      %p60 = scmp.ne.s32.totalorder %s48, %s49
      %p61 = scmp.eq.s32.totalorder %s18, 1
      %p62 = por %p60, %p61
      %p64 = scmp.ne.s32.totalorder %s49, %s63
      %p65 = scmp.eq.s32.totalorder %s18, 0
      %p66 = por %p64, %p65
      %s68 = sadd.s32 %s67, 1
      %p71 = scmp.eq.s32.totalorder %s12, 1
      %p72 = scmp.ne.s32.totalorder %s67, %s69
      %p73 = scmp.eq.s32.totalorder %s12, 0
      %p74 = por %p72, %p73
      %p75 = scmp.ne.s32.totalorder %s67, %s69
      %p76 = scmp.eq.s32.totalorder %s17, 1
      %p77 = por %p75, %p76
      %p78 = scmp.ne.s32.totalorder %s69, %s70
      %p79 = scmp.eq.s32.totalorder %s17, 0
      %p80 = por %p78, %p79
      %p81 = scmp.ne.s32.totalorder %s69, %s70
      %p82 = scmp.eq.s32.totalorder %s18, 1
      %p83 = por %p81, %p82
      %p85 = scmp.ne.s32.totalorder %s70, %s84
      %p86 = scmp.eq.s32.totalorder %s18, 0
      %p87 = por %p85, %p86
      %s88 = ssub.s32 %s12, %s19
      %p89 = scmp.eq.s32.totalorder %s88, 0
      %s91 = sadd.s32 %s90, 1
      %s92 = scalar_select %p89, %s90, %s91
      %p95 = pneg %p89
      %p96 = scmp.eq.s32.totalorder %s12, 1
      %p97 = por %p95, %p96
      %p98 = scmp.ne.s32.totalorder %s90, %s93
      %p99 = scmp.eq.s32.totalorder %s12, 0
      %p100 = por %p98, %p99
      %p101 = scmp.ne.s32.totalorder %s90, %s93
      %p102 = scmp.eq.s32.totalorder %s17, 1
      %p103 = por %p101, %p102
      %p104 = scmp.ne.s32.totalorder %s93, %s94
      %p105 = scmp.eq.s32.totalorder %s17, 0
      %p106 = por %p104, %p105
      %p107 = scmp.ne.s32.totalorder %s93, %s94
      %p108 = scmp.eq.s32.totalorder %s18, 1
      %p109 = por %p107, %p108
      %p111 = scmp.ne.s32.totalorder %s94, %s110
      %p112 = scmp.eq.s32.totalorder %s18, 0
      %p113 = por %p111, %p112
      %p114 = scmp.le.s32.totalorder 1, %s12
      %p115 = scmp.lt.s32.totalorder %s12, 3
      %p116 = pnand %p114, %p115
      %p117 = pneg %p116
      // Predicated region
      $region9: #{tpu_custom_call.1} parent=5 // pred_check
        _
      $region10: #{tpu_custom_call.1} parent=5 // pred_check_branch
        %119 = sbr.rel (%p116) target = $region12
      $region11: #{tpu_custom_call.1} parent=5 // pred_region
        %s120 = ssub.s32 %s12, 1
        // Predicated region
        $region13: #{tpu_custom_call.1} parent=11 // pred_check
          %p121 = pneg %p59
        $region14: #{tpu_custom_call.1} parent=11 // pred_check_branch
          %123 = sbr.rel (%p121) target = $region16
        $region15: #{tpu_custom_call.1} parent=11 // pred_region
          _
        $region16: #{tpu_custom_call.1} parent=11 // pred_fallthru
          _
        // Predicated region
        $region17: #{tpu_custom_call.1} parent=11 // pred_check
          %p124 = pneg %p80
        $region18: #{tpu_custom_call.1} parent=11 // pred_check_branch
          %126 = sbr.rel (%p124) target = $region20
        $region19: #{tpu_custom_call.1} parent=11 // pred_region
          _
        $region20: #{tpu_custom_call.1} parent=11 // pred_fallthru
          _
      $region12: #{tpu_custom_call.1} parent=5 // pred_fallthru
        _
      %p127 = scmp.lt.s32.totalorder %s12, 2
      // Predicated region
      $region21: #{tpu_custom_call.1} parent=5 // pred_check
        %p128 = pneg %p127
      $region22: #{tpu_custom_call.1} parent=5 // pred_check_branch
        %130 = sbr.rel (%p128) target = $region24
      $region23: #{tpu_custom_call.1} parent=5 // pred_region
        // Predicated region
        $region25: #{tpu_custom_call.1} parent=23 // pred_check
          %p131 = pneg %p32
        $region26: #{tpu_custom_call.1} parent=23 // pred_check_branch
          %133 = sbr.rel (%p131) target = $region28
        $region27: #{tpu_custom_call.1} parent=23 // pred_region
          %s134 = smul.u32 8, %s12
          %p135 = scmp.lt.s32.totalorder %s134, 15
          %s136 = scalar_select %p135, %s134, 15
          %s137 = smul.addr %s136, 4
          %s138 = scalar_lea.vmem %s0, %s137
          %s139 = smul.u32 8, %s12
        $region28: #{tpu_custom_call.1} parent=23 // pred_fallthru
          _
      $region24: #{tpu_custom_call.1} parent=5 // pred_fallthru
        _
      %p140 = scmp.le.s32.totalorder 1, %s12
      %p141 = scmp.lt.s32.totalorder %s12, 3
      %p142 = pnand %p140, %p141
      %p143 = pneg %p142
      // Predicated region
      $region29: #{tpu_custom_call.1} parent=5 // pred_check
        _
      $region30: #{tpu_custom_call.1} parent=5 // pred_check_branch
        %145 = sbr.rel (%p142) target = $region32
      $region31: #{tpu_custom_call.1} parent=5 // pred_region
        %s146 = ssub.s32 %s12, 1
        %s147 = smul.u32 8, %s17
        %p148 = scmp.lt.s32.totalorder %s147, 15
        %s149 = scalar_select %p148, %s147, 15
        %s150 = smul.addr %s149, 4
        %s151 = scalar_lea.vmem %s0, %s150
        %p152 = pneg %p38
        %p153 = pneg %p35
        %p154 = pneg %p59
        %p155 = pneg %p56
        %p156 = pneg %p80
        %p157 = pneg %p77
        %p158 = pneg %p106
        %p159 = pneg %p103
        %s160 = sand.u32 %s93, 1
        %s161 = scalar_lea.sflag [#allocation3], %s160
        %s162 = sand.u32 %s93, 1
        %s163 = smul.addr %s162, 128
        %s164 = scalar_lea.vmem [#allocation2], %s163
        %s165 = smul.u32 8, %s17
        %p166 = scmp.lt.s32.totalorder %s165, 15
        %s167 = scalar_select %p166, %s165, 15
        %s168 = smul.addr %s167, 4
        %s169 = scalar_lea.vmem %s0, %s168
        %s170 = smul.u32 8, %s17
        %s171 = smul.u32 8, %s17
        %v173 = vld [vmem:[%s169] sm:$0xf]
        %v174 = vld [vmem:[%s169 + $0x4] sm:$0xf]
        %v175 = vld [vmem:[%s169 + $0x8] sm:$0xf]
        %v176 = vld [vmem:[%s169 + $0xc] sm:$0xf]
        %v177 = vld [vmem:[%s169 + $0x10] sm:$0xf]
        %v178 = vld [vmem:[%s169 + $0x14] sm:$0xf]
        %v179 = vld [vmem:[%s169 + $0x18] sm:$0xf]
        %v180 = vld [vmem:[%s169 + $0x1c] sm:$0xf]
        %v181 = vld [vmem:[%s1] sm:$0xff]
        %v182 = vld [vmem:[%s1 + $0x8] sm:$0xff]
        %v183 = vld [vmem:[%s1 + $0x10] sm:$0xff]
        %v184 = vld [vmem:[%s1 + $0x18] sm:$0xff]
        %v185 = vld [vmem:[%s2] sm:$0x3]
        %v187 = vlaneseq
        %v188 = vshrl.u32 %v187, 7
        %v189 = vsub.s32 0, %v188
        %v190 = vrot.slane %v185, %v189
        %v191 = vlaneseq
        %v192 = vshrl.u32 %v191, 7
        %v193 = vsub.s32 1, %v192
        %v194 = vrot.slane %v185, %v193
        %v205 = vunpack.c.l.b16 %v173
        %v206 = vunpack.c.l.b16 %v174
        %v207 = vunpack.c.l.b16 %v175
        %v208 = vunpack.c.l.b16 %v176
        %v209 = vunpack.c.l.b16 %v177
        %v210 = vunpack.c.l.b16 %v178
        %v211 = vunpack.c.l.b16 %v179
        %v212 = vunpack.c.l.b16 %v180
        %v213 = vpack.c.b16 %v206, %v205
        %v214 = vpack.c.b16 %v208, %v207
        %v215 = vpack.c.b16 %v210, %v209
        %v216 = vpack.c.b16 %v212, %v211
        %v221 = vunpack.c.l.b16 %v181
        %v222 = vunpack.c.h.b16 %v181
        %v223 = vunpack.c.l.b16 %v182
        %v224 = vunpack.c.h.b16 %v182
        %v225 = vunpack.c.l.b16 %v183
        %v226 = vunpack.c.h.b16 %v183
        %v227 = vunpack.c.l.b16 %v184
        %v228 = vunpack.c.h.b16 %v184
        %v229 = vpack.c.b16 %v223, %v221
        %v230 = vpack.c.b16 %v224, %v222
        %v231 = vpack.c.b16 %v227, %v225
        %v232 = vpack.c.b16 %v228, %v226
        %vm237 = vcmask 261120
        %v239 = vsel %vm237, %v213, 0
        %v242 = vsel %vm237, %v214, 0
        %v245 = vsel %vm237, %v215, 0
        %v248 = vsel %vm237, %v216, 0
        %250 = vmatprep.subr.bf16.mxu0 %v230
        %251 = vmatpush1.bf16.msra.mxu0 %v229
        %252 = vmatprep.subr.bf16.mxu0 %v232
        %253 = vmatpush1.bf16.msra.mxu0 %v231
        %254 = vmatprep.subr.bf16.mxu0 0
        %255 = vmatpush1.bf16.msra.mxu0 0
        %256 = vmatprep.subr.bf16.mxu0 0
        %257 = vmatpush1.bf16.msra.mxu0 0
        %258 = vmatprep.subr.bf16.mxu0 0
        %259 = vmatpush1.bf16.msra.mxu0 0
        %260 = vmatprep.subr.bf16.mxu0 0
        %261 = vmatpush1.bf16.msra.mxu0 0
        %262 = vmatprep.subr.bf16.mxu0 0
        %263 = vmatpush1.bf16.msra.mxu0 0
        %264 = vmatprep.subr.bf16.mxu0 0
        %265 = vmatpush1.bf16.msra.mxu0 0
        %266 = vmatprep.subr.bf16.mxu0 0
        %267 = vmatpush1.bf16.msra.mxu0 0
        %268 = vmatprep.subr.bf16.mxu0 0
        %269 = vmatpush1.bf16.msra.mxu0 0
        %270 = vmatprep.subr.bf16.mxu0 0
        %271 = vmatpush1.bf16.msra.mxu0 0
        %272 = vmatprep.subr.bf16.mxu0 0
        %273 = vmatpush1.bf16.msra.mxu0 0
        %274 = vmatprep.subr.bf16.mxu0 0
        %275 = vmatpush1.bf16.msra.mxu0 0
        %276 = vmatprep.subr.bf16.mxu0 0
        %277 = vmatpush1.bf16.msra.mxu0 0
        %278 = vmatprep.subr.bf16.mxu0 0
        %279 = vmatpush1.bf16.msra.mxu0 0
        %280 = vmatprep.subr.bf16.mxu0 0
        %281 = vmatpush1.bf16.msra.mxu0 0
        %282 = vmatprep.mubr.bf16.mxu0 0
        %283 = vmatmul.mubr.bf16.gmra.mrb[0].mxu0 %v239
        %v284 = vpop.f32.mrb[0].mxu0
        %v285 = vadd.f32 %v190, %v284
        %v286 = vpop.f32.mrb[0].mxu0
        %v287 = vadd.f32 %v194, %v286
        %v288 = vpop.f32.mrb[0].mxu0
        %v289 = vadd.f32 %v190, %v288
        %v290 = vpop.f32.mrb[0].mxu0
        %v291 = vadd.f32 %v194, %v290
        %292 = vmatprep.mubr.bf16.mxu0 0
        %293 = vmatmul.mubr.bf16.gmra.mrb[0].mxu0 %v242
        %v294 = vpop.f32.mrb[0].mxu0
        %v295 = vadd.f32 %v190, %v294
        %v296 = vpop.f32.mrb[0].mxu0
        %v297 = vadd.f32 %v194, %v296
        %v298 = vpop.f32.mrb[0].mxu0
        %v299 = vadd.f32 %v190, %v298
        %v300 = vpop.f32.mrb[0].mxu0
        %v301 = vadd.f32 %v194, %v300
        %302 = vmatprep.mubr.bf16.mxu0 0
        %303 = vmatmul.mubr.bf16.gmra.mrb[0].mxu0 %v245
        %v304 = vpop.f32.mrb[0].mxu0
        %v305 = vadd.f32 %v190, %v304
        %v306 = vpop.f32.mrb[0].mxu0
        %v307 = vadd.f32 %v194, %v306
        %v308 = vpop.f32.mrb[0].mxu0
        %v309 = vadd.f32 %v190, %v308
        %v310 = vpop.f32.mrb[0].mxu0
        %v311 = vadd.f32 %v194, %v310
        %312 = vmatprep.mubr.bf16.mxu0 0
        %313 = vmatmul.mubr.bf16.gmra.mrb[0].mxu0 %v248
        %v314 = vpop.f32.mrb[0].mxu0
        %v315 = vadd.f32 %v190, %v314
        %v316 = vpop.f32.mrb[0].mxu0
        %v317 = vadd.f32 %v194, %v316
        %v318 = vpop.f32.mrb[0].mxu0
        %v319 = vadd.f32 %v190, %v318
        %v320 = vpop.f32.mrb[0].mxu0
        %v321 = vadd.f32 %v194, %v320
        %322 = vdwg.mxu0
        %323 = vst [vmem:[%s164] sm:$0xff] %v285
        %324 = vst [vmem:[%s164 + $0x8] sm:$0xff] %v287
        %325 = vst [vmem:[%s164 + $0x10] sm:$0xff] %v289
        %326 = vst [vmem:[%s164 + $0x18] sm:$0xff] %v291
        %327 = vst [vmem:[%s164 + $0x20] sm:$0xff] %v295
        %328 = vst [vmem:[%s164 + $0x28] sm:$0xff] %v297
        %329 = vst [vmem:[%s164 + $0x30] sm:$0xff] %v299
        %330 = vst [vmem:[%s164 + $0x38] sm:$0xff] %v301
        %331 = vst [vmem:[%s164 + $0x40] sm:$0xff] %v305
        %332 = vst [vmem:[%s164 + $0x48] sm:$0xff] %v307
        %333 = vst [vmem:[%s164 + $0x50] sm:$0xff] %v309
        %334 = vst [vmem:[%s164 + $0x58] sm:$0xff] %v311
        %335 = vst [vmem:[%s164 + $0x60] sm:$0xff] %v315
        %336 = vst [vmem:[%s164 + $0x68] sm:$0xff] %v317
        %337 = vst [vmem:[%s164 + $0x70] sm:$0xff] %v319
        %338 = vst [vmem:[%s164 + $0x78] sm:$0xff] %v321
        %s339 = sand.u32 %s93, 1
        %s340 = scalar_lea.sflag [#allocation3], %s339
        %s341 = sand.u32 %s93, 1
        %s342 = smul.addr %s341, 128
        %s343 = scalar_lea.vmem [#allocation2], %s342
        // Predicated region
        $region33: #{tpu_custom_call.1} parent=31 // pred_check
          %p344 = pneg %p103
        $region34: #{tpu_custom_call.1} parent=31 // pred_check_branch
          %346 = sbr.rel (%p344) target = $region36
        $region35: #{tpu_custom_call.1} parent=31 // pred_region
          %s347 = smul.u32 8, %s17
          %s349 = ssub.s32 2048, 2048
          %350 = vsyncadd %s340, %s349
          %s351 = smul.addr %s347, 2
          %s352 = smul.addr %s351, 128
          %s353 = scalar_lea.hbm %s3, %s352
          %s354 = sshll.u32 %s343, 4
          %s355 = int_to_ptr.vmem [resolvable:$true] %s354
          %360 = dma.vmem_to_hbm [thread:$0]  %s355, 2048, %s353, %s340, 256, 256, 16
        $region36: #{tpu_custom_call.1} parent=31 // pred_fallthru
          _
      $region32: #{tpu_custom_call.1} parent=5 // pred_fallthru
        _
      %p361 = scmp.le.s32.totalorder 2, %s12
      // Predicated region
      $region37: #{tpu_custom_call.1} parent=5 // pred_check
        %p362 = pneg %p361
      $region38: #{tpu_custom_call.1} parent=5 // pred_check_branch
        %364 = sbr.rel (%p362) target = $region40
      $region39: #{tpu_custom_call.1} parent=5 // pred_region
        %s365 = ssub.s32 %s12, 2
        // Predicated region
        $region41: #{tpu_custom_call.1} parent=39 // pred_check
          %p366 = pneg %p109
        $region42: #{tpu_custom_call.1} parent=39 // pred_check_branch
          %368 = sbr.rel (%p366) target = $region44
        $region43: #{tpu_custom_call.1} parent=39 // pred_region
          %s369 = sand.u32 %s94, 1
          %s370 = scalar_lea.sflag [#allocation3], %s369
          %s371 = sand.u32 %s94, 1
          %s372 = smul.addr %s371, 128
          %s373 = scalar_lea.vmem [#allocation2], %s372
          %374 = dma.done %s370, 2048
        $region44: #{tpu_custom_call.1} parent=39 // pred_fallthru
          _
      $region40: #{tpu_custom_call.1} parent=5 // pred_fallthru
        _
    $region6: #{tpu_custom_call.1} parent=1 // loop_footer
      %s16 = sadd.s32 1, %s12
    $region7: #{tpu_custom_call.1} parent=1 // loop_footer_branch
      %11 = sbr.rel target = $region3
    $region8: #{tpu_custom_call.1} parent=1 // loop_exit
      _
    %375 = vsyncpa [#allocation3], 1
    %s376 = scalar_lea.sflag [#allocation3], 1
    %377 = vsyncpa %s376, 1

</llo_original>
